<compile_context>
chip_gen: v7x
topology: tpu7x:2x2x1
jax: 0.10.0
libtpu: 0.0.40
codegen_flags: <defaults>
</compile_context>

<pallas_src>
import jax
import jax.numpy as jnp
from jax.experimental import pallas as pl
from jax.experimental.pallas import tpu as pltpu

# ---- packed-parameter layout (torch nn.Linear layout: W is (out, in), b is (out,)) ----
W0_OFF, B0_OFF = 0, 16          # input_layer:    W (4,4), b (4,)
W1_OFF, B1_OFF = 20, 36         # hidden_layer_1: W (4,4), b (4,)
W2_OFF, B2_OFF = 40, 48         # hidden_layer_2: W (2,4), b (2,)
W3_OFF, B3_OFF = 50, 52         # output_layer:   W (1,2), b (1,)
N_PARAMS = 53

LANE = 128                      # vreg lane width
SUB = 8                         # vreg sublanes
UNIT = SUB * LANE               # batch padding granularity: one full (8,128) slab
MAX_TILE_COLS = 16 * 1024       # 128K batch elems/tile; ~5 MiB double-buffered (in+out)
MIN_SPLIT_COLS = 4 * 1024       # only split a lone tile in two if each half moves >= ~0.6 MiB


def _mlp_kernel(p_ref, x_ref, o_ref):
    """p_ref: (53,) f32 scalar-prefetch (SMEM). x_ref: (4, 8, C). o_ref: (8, C)."""
    rows = [x_ref[k] for k in range(4)]             # four dense (8, C) feature slabs

    def layer(in_rows, w_off, b_off, in_dim, out_dim, relu):
        outs = []
        for j in range(out_dim):                    # fully unrolled: pure VPU broadcast-FMAs
            acc = in_rows[0] * p_ref[w_off + j * in_dim]
            for k in range(1, in_dim):
                acc = acc + in_rows[k] * p_ref[w_off + j * in_dim + k]
            acc = acc + p_ref[b_off + j]
            if relu:
                acc = jnp.maximum(acc, 0.0)
            outs.append(acc)
        return outs

    h = layer(rows, W0_OFF, B0_OFF, 4, 4, relu=True)    # input_layer  + ReLU
    h = layer(h,    W1_OFF, B1_OFF, 4, 4, relu=True)    # hidden_1     + ReLU
    h = layer(h,    W2_OFF, B2_OFF, 4, 2, relu=True)    # hidden_2     + ReLU
    h = layer(h,    W3_OFF, B3_OFF, 2, 1, relu=False)   # output_layer
    # sigmoid(z) = 1 / (1 + exp(-z)); exp and approx-reciprocal both run on the EUP slot,
    # keeping the binding VALU slot free.
    o_ref[...] = pl.reciprocal(1.0 + jnp.exp(-h[0]), approx=True)


def _pick_tiling(batch):
    """Static (trace-time) choice of padded batch and lane-tile size.

    Returns (padded_batch, tile_cols) with padded_batch == 8 * n_tiles * tile_cols and
    tile_cols a multiple of 128, sized so that (a) per-step traffic is ~1-2.5 MiB,
    (b) the "parallel" grid has >= 2 steps (two v7x TensorCores) once there is enough
    work, (c) the double-buffered footprint stays well under v5e's 16 MiB scoped VMEM.
    """
    bp = -(-batch // UNIT) * UNIT
    cols = bp // SUB                                  # multiple of LANE
    if cols <= MAX_TILE_COLS and cols < 2 * MIN_SPLIT_COLS:
        n_tiles = 1
    else:
        n_tiles = max(2, -(-cols // MAX_TILE_COLS))
    per = -(-cols // n_tiles)
    tile_cols = -(-per // LANE) * LANE                # ceil to 128-lane multiple (<= MAX_TILE_COLS)
    cols = n_tiles * tile_cols
    return cols * SUB, tile_cols


def _forward_feature_major(x_fm, packed_params):
    """x_fm: (4, B) float32 (feature-major). Returns (B,) float32 sigmoid outputs."""
    F, B = x_fm.shape
    assert F == 4
    Bp, tile_cols = _pick_tiling(B)
    x_fm = x_fm.astype(jnp.float32)
    if Bp > B:
        x_fm = jnp.pad(x_fm, ((0, 0), (0, Bp - B)))   # padded cols are sliced off below
    cols = Bp // SUB
    x3 = x_fm.reshape(4, SUB, cols)                   # free, contiguous reshape: fills sublanes

    out = pl.pallas_call(
        _mlp_kernel,
        out_shape=jax.ShapeDtypeStruct((SUB, cols), jnp.float32),
        grid_spec=pltpu.PrefetchScalarGridSpec(
            num_scalar_prefetch=1,                    # 53 params -> one pre-grid SMEM copy
            grid=(cols // tile_cols,),
            in_specs=[
                # Dense (4, 8, tile_cols) batch tile; last two dims are (8,128)-aligned.
                pl.BlockSpec((4, SUB, tile_cols), lambda i, p: (0, 0, i)),
            ],
            # Lane- and sublane-dense output tile: full-width unmasked stores.
            out_specs=pl.BlockSpec((SUB, tile_cols), lambda i, p: (0, i)),
        ),
        compiler_params=pltpu.CompilerParams(
            dimension_semantics=("parallel",)),       # sharded across TCs on v7x
    )(packed_params, x3)

    return out.reshape(Bp)[:B]


network_forward_feature_major = jax.jit(_forward_feature_major)


@jax.jit
def network_forward(x, packed_params):
    """Spec-compliant entry point. x: (B, 4) float32. Returns (B, 1) float32."""
    # TODO(synk): this transpose is one extra XLA HBM pass; producers that can emit the
    # batch feature-major should call network_forward_feature_major directly.
    y = _forward_feature_major(x.astype(jnp.float32).T, packed_params)
    return y[:, None]


# ------------------------- parameter setup / reference -------------------------

def init_params(key):
    """PyTorch nn.Linear default init (uniform +/- 1/sqrt(fan_in)); torch layout W=(out,in)."""
    def linear_init(k, fan_in, fan_out):
        kw, kb = jax.random.split(k)
        bound = 1.0 / float(fan_in) ** 0.5
        w = jax.random.uniform(kw, (fan_out, fan_in), jnp.float32, -bound, bound)
        b = jax.random.uniform(kb, (fan_out,), jnp.float32, -bound, bound)
        return w, b

    k0, k1, k2, k3 = jax.random.split(key, 4)
    w0, b0 = linear_init(k0, 4, 4)   # input_layer
    w1, b1 = linear_init(k1, 4, 4)   # hidden_layer_1
    w2, b2 = linear_init(k2, 4, 2)   # hidden_layer_2
    w3, b3 = linear_init(k3, 2, 1)   # output_layer
    return {"w0": w0, "b0": b0, "w1": w1, "b1": b1,
            "w2": w2, "b2": b2, "w3": w3, "b3": b3}


def pack_params(p):
    flat = jnp.concatenate([
        p["w0"].reshape(-1), p["b0"].reshape(-1),
        p["w1"].reshape(-1), p["b1"].reshape(-1),
        p["w2"].reshape(-1), p["b2"].reshape(-1),
        p["w3"].reshape(-1), p["b3"].reshape(-1),
    ]).astype(jnp.float32)
    assert flat.shape == (N_PARAMS,)
    return flat


def reference_forward(x, p):
    h = jnp.maximum(x @ p["w0"].T + p["b0"], 0.0)
    h = jnp.maximum(h @ p["w1"].T + p["b1"], 0.0)
    h = jnp.maximum(h @ p["w2"].T + p["b2"], 0.0)
    return jax.nn.sigmoid(h @ p["w3"].T + p["b3"])


# TODO(synk): loss / SGD optimizer / to_json from the PyTorch module are training &
# serialization utilities, not part of the forward pass; not implemented as kernels.

if __name__ == "__main__":
    key = jax.random.PRNGKey(0)
    kp, kx_small, kx_big = jax.random.split(key, 3)

    params = init_params(kp)
    packed = pack_params(params)

    # Small batch (single 128-col tile) plus a larger one that exercises batch padding
    # and the >=2-step "parallel" grid path.
    for B, kb in ((16, kx_small), (70_000, kx_big)):
        x = jax.random.normal(kb, (B, 4), jnp.float32)
        out = jax.block_until_ready(network_forward(x, packed))
        ref = reference_forward(x, params)
        assert out.shape == (B, 1)
        # Tolerance relaxed slightly for the EUP approximate-reciprocal sigmoid.
        assert jnp.allclose(out, ref, atol=2e-3, rtol=2e-3), "mismatch vs pure-JAX reference"

    print("KERNEL_OK")
</pallas_src>

<mosaic_0001>
module attributes {stable_mosaic.version = 11 : i64} {
  func.func @_mlp_kernel(%arg0: i32, %arg1: memref<53xf32, #tpu.memory_space<smem>>, %arg2: memref<4x8x128xf32, #tpu.memory_space<vmem>>, %arg3: memref<8x128xf32, #tpu.memory_space<vmem>>) attributes {dimension_semantics = [#tpu.dimension_semantics<parallel>], iteration_bounds = array<i64: 1>, scalar_prefetch = 1 : i64, scratch_operands = 0 : i64, tpu.core_type = #tpu.core_type<tc>, window_params = [{transform_indices = @transform_0, window_bounds = array<i64: 4, 8, 128>}, {transform_indices = @transform_1, window_bounds = array<i64: 8, 128>}]} {
    %c0 = arith.constant 0 : index
    %c0_0 = arith.constant 0 : index
    %c0_1 = arith.constant 0 : index
    %0 = vector.load %arg2[%c0, %c0_0, %c0_1] : memref<4x8x128xf32, #tpu.memory_space<vmem>>, vector<1x8x128xf32>
    %1 = vector.shape_cast %0 : vector<1x8x128xf32> to vector<8x128xf32>
    %c1 = arith.constant 1 : index
    %c0_2 = arith.constant 0 : index
    %c0_3 = arith.constant 0 : index
    %2 = vector.load %arg2[%c1, %c0_2, %c0_3] : memref<4x8x128xf32, #tpu.memory_space<vmem>>, vector<1x8x128xf32>
    %3 = vector.shape_cast %2 : vector<1x8x128xf32> to vector<8x128xf32>
    %c2 = arith.constant 2 : index
    %c0_4 = arith.constant 0 : index
    %c0_5 = arith.constant 0 : index
    %4 = vector.load %arg2[%c2, %c0_4, %c0_5] : memref<4x8x128xf32, #tpu.memory_space<vmem>>, vector<1x8x128xf32>
    %5 = vector.shape_cast %4 : vector<1x8x128xf32> to vector<8x128xf32>
    %c3 = arith.constant 3 : index
    %c0_6 = arith.constant 0 : index
    %c0_7 = arith.constant 0 : index
    %6 = vector.load %arg2[%c3, %c0_6, %c0_7] : memref<4x8x128xf32, #tpu.memory_space<vmem>>, vector<1x8x128xf32>
    %7 = vector.shape_cast %6 : vector<1x8x128xf32> to vector<8x128xf32>
    %c0_8 = arith.constant 0 : index
    %8 = memref.load %arg1[%c0_8] : memref<53xf32, #tpu.memory_space<smem>>
    %9 = vector.broadcast %8 : f32 to vector<8x128xf32>
    %10 = arith.mulf %1, %9 : vector<8x128xf32>
    %c1_9 = arith.constant 1 : index
    %11 = memref.load %arg1[%c1_9] : memref<53xf32, #tpu.memory_space<smem>>
    %12 = vector.broadcast %11 : f32 to vector<8x128xf32>
    %13 = arith.mulf %3, %12 : vector<8x128xf32>
    %14 = arith.addf %10, %13 : vector<8x128xf32>
    %c2_10 = arith.constant 2 : index
    %15 = memref.load %arg1[%c2_10] : memref<53xf32, #tpu.memory_space<smem>>
    %16 = vector.broadcast %15 : f32 to vector<8x128xf32>
    %17 = arith.mulf %5, %16 : vector<8x128xf32>
    %18 = arith.addf %14, %17 : vector<8x128xf32>
    %c3_11 = arith.constant 3 : index
    %19 = memref.load %arg1[%c3_11] : memref<53xf32, #tpu.memory_space<smem>>
    %20 = vector.broadcast %19 : f32 to vector<8x128xf32>
    %21 = arith.mulf %7, %20 : vector<8x128xf32>
    %22 = arith.addf %18, %21 : vector<8x128xf32>
    %c16 = arith.constant 16 : index
    %23 = memref.load %arg1[%c16] : memref<53xf32, #tpu.memory_space<smem>>
    %24 = vector.broadcast %23 : f32 to vector<8x128xf32>
    %25 = arith.addf %22, %24 : vector<8x128xf32>
    %cst = arith.constant 0.000000e+00 : f32
    %26 = vector.broadcast %cst : f32 to vector<8x128xf32>
    %27 = arith.maximumf %25, %26 : vector<8x128xf32>
    %c4 = arith.constant 4 : index
    %28 = memref.load %arg1[%c4] : memref<53xf32, #tpu.memory_space<smem>>
    %29 = vector.broadcast %28 : f32 to vector<8x128xf32>
    %30 = arith.mulf %1, %29 : vector<8x128xf32>
    %c5 = arith.constant 5 : index
    %31 = memref.load %arg1[%c5] : memref<53xf32, #tpu.memory_space<smem>>
    %32 = vector.broadcast %31 : f32 to vector<8x128xf32>
    %33 = arith.mulf %3, %32 : vector<8x128xf32>
    %34 = arith.addf %30, %33 : vector<8x128xf32>
    %c6 = arith.constant 6 : index
    %35 = memref.load %arg1[%c6] : memref<53xf32, #tpu.memory_space<smem>>
    %36 = vector.broadcast %35 : f32 to vector<8x128xf32>
    %37 = arith.mulf %5, %36 : vector<8x128xf32>
    %38 = arith.addf %34, %37 : vector<8x128xf32>
    %c7 = arith.constant 7 : index
    %39 = memref.load %arg1[%c7] : memref<53xf32, #tpu.memory_space<smem>>
    %40 = vector.broadcast %39 : f32 to vector<8x128xf32>
    %41 = arith.mulf %7, %40 : vector<8x128xf32>
    %42 = arith.addf %38, %41 : vector<8x128xf32>
    %c17 = arith.constant 17 : index
    %43 = memref.load %arg1[%c17] : memref<53xf32, #tpu.memory_space<smem>>
    %44 = vector.broadcast %43 : f32 to vector<8x128xf32>
    %45 = arith.addf %42, %44 : vector<8x128xf32>
    %cst_12 = arith.constant 0.000000e+00 : f32
    %46 = vector.broadcast %cst_12 : f32 to vector<8x128xf32>
    %47 = arith.maximumf %45, %46 : vector<8x128xf32>
    %c8 = arith.constant 8 : index
    %48 = memref.load %arg1[%c8] : memref<53xf32, #tpu.memory_space<smem>>
    %49 = vector.broadcast %48 : f32 to vector<8x128xf32>
    %50 = arith.mulf %1, %49 : vector<8x128xf32>
    %c9 = arith.constant 9 : index
    %51 = memref.load %arg1[%c9] : memref<53xf32, #tpu.memory_space<smem>>
    %52 = vector.broadcast %51 : f32 to vector<8x128xf32>
    %53 = arith.mulf %3, %52 : vector<8x128xf32>
    %54 = arith.addf %50, %53 : vector<8x128xf32>
    %c10 = arith.constant 10 : index
    %55 = memref.load %arg1[%c10] : memref<53xf32, #tpu.memory_space<smem>>
    %56 = vector.broadcast %55 : f32 to vector<8x128xf32>
    %57 = arith.mulf %5, %56 : vector<8x128xf32>
    %58 = arith.addf %54, %57 : vector<8x128xf32>
    %c11 = arith.constant 11 : index
    %59 = memref.load %arg1[%c11] : memref<53xf32, #tpu.memory_space<smem>>
    %60 = vector.broadcast %59 : f32 to vector<8x128xf32>
    %61 = arith.mulf %7, %60 : vector<8x128xf32>
    %62 = arith.addf %58, %61 : vector<8x128xf32>
    %c18 = arith.constant 18 : index
    %63 = memref.load %arg1[%c18] : memref<53xf32, #tpu.memory_space<smem>>
    %64 = vector.broadcast %63 : f32 to vector<8x128xf32>
    %65 = arith.addf %62, %64 : vector<8x128xf32>
    %cst_13 = arith.constant 0.000000e+00 : f32
    %66 = vector.broadcast %cst_13 : f32 to vector<8x128xf32>
    %67 = arith.maximumf %65, %66 : vector<8x128xf32>
    %c12 = arith.constant 12 : index
    %68 = memref.load %arg1[%c12] : memref<53xf32, #tpu.memory_space<smem>>
    %69 = vector.broadcast %68 : f32 to vector<8x128xf32>
    %70 = arith.mulf %1, %69 : vector<8x128xf32>
    %c13 = arith.constant 13 : index
    %71 = memref.load %arg1[%c13] : memref<53xf32, #tpu.memory_space<smem>>
    %72 = vector.broadcast %71 : f32 to vector<8x128xf32>
    %73 = arith.mulf %3, %72 : vector<8x128xf32>
    %74 = arith.addf %70, %73 : vector<8x128xf32>
    %c14 = arith.constant 14 : index
    %75 = memref.load %arg1[%c14] : memref<53xf32, #tpu.memory_space<smem>>
    %76 = vector.broadcast %75 : f32 to vector<8x128xf32>
    %77 = arith.mulf %5, %76 : vector<8x128xf32>
    %78 = arith.addf %74, %77 : vector<8x128xf32>
    %c15 = arith.constant 15 : index
    %79 = memref.load %arg1[%c15] : memref<53xf32, #tpu.memory_space<smem>>
    %80 = vector.broadcast %79 : f32 to vector<8x128xf32>
    %81 = arith.mulf %7, %80 : vector<8x128xf32>
    %82 = arith.addf %78, %81 : vector<8x128xf32>
    %c19 = arith.constant 19 : index
    %83 = memref.load %arg1[%c19] : memref<53xf32, #tpu.memory_space<smem>>
    %84 = vector.broadcast %83 : f32 to vector<8x128xf32>
    %85 = arith.addf %82, %84 : vector<8x128xf32>
    %cst_14 = arith.constant 0.000000e+00 : f32
    %86 = vector.broadcast %cst_14 : f32 to vector<8x128xf32>
    %87 = arith.maximumf %85, %86 : vector<8x128xf32>
    %c20 = arith.constant 20 : index
    %88 = memref.load %arg1[%c20] : memref<53xf32, #tpu.memory_space<smem>>
    %89 = vector.broadcast %88 : f32 to vector<8x128xf32>
    %90 = arith.mulf %27, %89 : vector<8x128xf32>
    %c21 = arith.constant 21 : index
    %91 = memref.load %arg1[%c21] : memref<53xf32, #tpu.memory_space<smem>>
    %92 = vector.broadcast %91 : f32 to vector<8x128xf32>
    %93 = arith.mulf %47, %92 : vector<8x128xf32>
    %94 = arith.addf %90, %93 : vector<8x128xf32>
    %c22 = arith.constant 22 : index
    %95 = memref.load %arg1[%c22] : memref<53xf32, #tpu.memory_space<smem>>
    %96 = vector.broadcast %95 : f32 to vector<8x128xf32>
    %97 = arith.mulf %67, %96 : vector<8x128xf32>
    %98 = arith.addf %94, %97 : vector<8x128xf32>
    %c23 = arith.constant 23 : index
    %99 = memref.load %arg1[%c23] : memref<53xf32, #tpu.memory_space<smem>>
    %100 = vector.broadcast %99 : f32 to vector<8x128xf32>
    %101 = arith.mulf %87, %100 : vector<8x128xf32>
    %102 = arith.addf %98, %101 : vector<8x128xf32>
    %c36 = arith.constant 36 : index
    %103 = memref.load %arg1[%c36] : memref<53xf32, #tpu.memory_space<smem>>
    %104 = vector.broadcast %103 : f32 to vector<8x128xf32>
    %105 = arith.addf %102, %104 : vector<8x128xf32>
    %cst_15 = arith.constant 0.000000e+00 : f32
    %106 = vector.broadcast %cst_15 : f32 to vector<8x128xf32>
    %107 = arith.maximumf %105, %106 : vector<8x128xf32>
    %c24 = arith.constant 24 : index
    %108 = memref.load %arg1[%c24] : memref<53xf32, #tpu.memory_space<smem>>
    %109 = vector.broadcast %108 : f32 to vector<8x128xf32>
    %110 = arith.mulf %27, %109 : vector<8x128xf32>
    %c25 = arith.constant 25 : index
    %111 = memref.load %arg1[%c25] : memref<53xf32, #tpu.memory_space<smem>>
    %112 = vector.broadcast %111 : f32 to vector<8x128xf32>
    %113 = arith.mulf %47, %112 : vector<8x128xf32>
    %114 = arith.addf %110, %113 : vector<8x128xf32>
    %c26 = arith.constant 26 : index
    %115 = memref.load %arg1[%c26] : memref<53xf32, #tpu.memory_space<smem>>
    %116 = vector.broadcast %115 : f32 to vector<8x128xf32>
    %117 = arith.mulf %67, %116 : vector<8x128xf32>
    %118 = arith.addf %114, %117 : vector<8x128xf32>
    %c27 = arith.constant 27 : index
    %119 = memref.load %arg1[%c27] : memref<53xf32, #tpu.memory_space<smem>>
    %120 = vector.broadcast %119 : f32 to vector<8x128xf32>
    %121 = arith.mulf %87, %120 : vector<8x128xf32>
    %122 = arith.addf %118, %121 : vector<8x128xf32>
    %c37 = arith.constant 37 : index
    %123 = memref.load %arg1[%c37] : memref<53xf32, #tpu.memory_space<smem>>
    %124 = vector.broadcast %123 : f32 to vector<8x128xf32>
    %125 = arith.addf %122, %124 : vector<8x128xf32>
    %cst_16 = arith.constant 0.000000e+00 : f32
    %126 = vector.broadcast %cst_16 : f32 to vector<8x128xf32>
    %127 = arith.maximumf %125, %126 : vector<8x128xf32>
    %c28 = arith.constant 28 : index
    %128 = memref.load %arg1[%c28] : memref<53xf32, #tpu.memory_space<smem>>
    %129 = vector.broadcast %128 : f32 to vector<8x128xf32>
    %130 = arith.mulf %27, %129 : vector<8x128xf32>
    %c29 = arith.constant 29 : index
    %131 = memref.load %arg1[%c29] : memref<53xf32, #tpu.memory_space<smem>>
    %132 = vector.broadcast %131 : f32 to vector<8x128xf32>
    %133 = arith.mulf %47, %132 : vector<8x128xf32>
    %134 = arith.addf %130, %133 : vector<8x128xf32>
    %c30 = arith.constant 30 : index
    %135 = memref.load %arg1[%c30] : memref<53xf32, #tpu.memory_space<smem>>
    %136 = vector.broadcast %135 : f32 to vector<8x128xf32>
    %137 = arith.mulf %67, %136 : vector<8x128xf32>
    %138 = arith.addf %134, %137 : vector<8x128xf32>
    %c31 = arith.constant 31 : index
    %139 = memref.load %arg1[%c31] : memref<53xf32, #tpu.memory_space<smem>>
    %140 = vector.broadcast %139 : f32 to vector<8x128xf32>
    %141 = arith.mulf %87, %140 : vector<8x128xf32>
    %142 = arith.addf %138, %141 : vector<8x128xf32>
    %c38 = arith.constant 38 : index
    %143 = memref.load %arg1[%c38] : memref<53xf32, #tpu.memory_space<smem>>
    %144 = vector.broadcast %143 : f32 to vector<8x128xf32>
    %145 = arith.addf %142, %144 : vector<8x128xf32>
    %cst_17 = arith.constant 0.000000e+00 : f32
    %146 = vector.broadcast %cst_17 : f32 to vector<8x128xf32>
    %147 = arith.maximumf %145, %146 : vector<8x128xf32>
    %c32 = arith.constant 32 : index
    %148 = memref.load %arg1[%c32] : memref<53xf32, #tpu.memory_space<smem>>
    %149 = vector.broadcast %148 : f32 to vector<8x128xf32>
    %150 = arith.mulf %27, %149 : vector<8x128xf32>
    %c33 = arith.constant 33 : index
    %151 = memref.load %arg1[%c33] : memref<53xf32, #tpu.memory_space<smem>>
    %152 = vector.broadcast %151 : f32 to vector<8x128xf32>
    %153 = arith.mulf %47, %152 : vector<8x128xf32>
    %154 = arith.addf %150, %153 : vector<8x128xf32>
    %c34 = arith.constant 34 : index
    %155 = memref.load %arg1[%c34] : memref<53xf32, #tpu.memory_space<smem>>
    %156 = vector.broadcast %155 : f32 to vector<8x128xf32>
    %157 = arith.mulf %67, %156 : vector<8x128xf32>
    %158 = arith.addf %154, %157 : vector<8x128xf32>
    %c35 = arith.constant 35 : index
    %159 = memref.load %arg1[%c35] : memref<53xf32, #tpu.memory_space<smem>>
    %160 = vector.broadcast %159 : f32 to vector<8x128xf32>
    %161 = arith.mulf %87, %160 : vector<8x128xf32>
    %162 = arith.addf %158, %161 : vector<8x128xf32>
    %c39 = arith.constant 39 : index
    %163 = memref.load %arg1[%c39] : memref<53xf32, #tpu.memory_space<smem>>
    %164 = vector.broadcast %163 : f32 to vector<8x128xf32>
    %165 = arith.addf %162, %164 : vector<8x128xf32>
    %cst_18 = arith.constant 0.000000e+00 : f32
    %166 = vector.broadcast %cst_18 : f32 to vector<8x128xf32>
    %167 = arith.maximumf %165, %166 : vector<8x128xf32>
    %c40 = arith.constant 40 : index
    %168 = memref.load %arg1[%c40] : memref<53xf32, #tpu.memory_space<smem>>
    %169 = vector.broadcast %168 : f32 to vector<8x128xf32>
    %170 = arith.mulf %107, %169 : vector<8x128xf32>
    %c41 = arith.constant 41 : index
    %171 = memref.load %arg1[%c41] : memref<53xf32, #tpu.memory_space<smem>>
    %172 = vector.broadcast %171 : f32 to vector<8x128xf32>
    %173 = arith.mulf %127, %172 : vector<8x128xf32>
    %174 = arith.addf %170, %173 : vector<8x128xf32>
    %c42 = arith.constant 42 : index
    %175 = memref.load %arg1[%c42] : memref<53xf32, #tpu.memory_space<smem>>
    %176 = vector.broadcast %175 : f32 to vector<8x128xf32>
    %177 = arith.mulf %147, %176 : vector<8x128xf32>
    %178 = arith.addf %174, %177 : vector<8x128xf32>
    %c43 = arith.constant 43 : index
    %179 = memref.load %arg1[%c43] : memref<53xf32, #tpu.memory_space<smem>>
    %180 = vector.broadcast %179 : f32 to vector<8x128xf32>
    %181 = arith.mulf %167, %180 : vector<8x128xf32>
    %182 = arith.addf %178, %181 : vector<8x128xf32>
    %c48 = arith.constant 48 : index
    %183 = memref.load %arg1[%c48] : memref<53xf32, #tpu.memory_space<smem>>
    %184 = vector.broadcast %183 : f32 to vector<8x128xf32>
    %185 = arith.addf %182, %184 : vector<8x128xf32>
    %cst_19 = arith.constant 0.000000e+00 : f32
    %186 = vector.broadcast %cst_19 : f32 to vector<8x128xf32>
    %187 = arith.maximumf %185, %186 : vector<8x128xf32>
    %c44 = arith.constant 44 : index
    %188 = memref.load %arg1[%c44] : memref<53xf32, #tpu.memory_space<smem>>
    %189 = vector.broadcast %188 : f32 to vector<8x128xf32>
    %190 = arith.mulf %107, %189 : vector<8x128xf32>
    %c45 = arith.constant 45 : index
    %191 = memref.load %arg1[%c45] : memref<53xf32, #tpu.memory_space<smem>>
    %192 = vector.broadcast %191 : f32 to vector<8x128xf32>
    %193 = arith.mulf %127, %192 : vector<8x128xf32>
    %194 = arith.addf %190, %193 : vector<8x128xf32>
    %c46 = arith.constant 46 : index
    %195 = memref.load %arg1[%c46] : memref<53xf32, #tpu.memory_space<smem>>
    %196 = vector.broadcast %195 : f32 to vector<8x128xf32>
    %197 = arith.mulf %147, %196 : vector<8x128xf32>
    %198 = arith.addf %194, %197 : vector<8x128xf32>
    %c47 = arith.constant 47 : index
    %199 = memref.load %arg1[%c47] : memref<53xf32, #tpu.memory_space<smem>>
    %200 = vector.broadcast %199 : f32 to vector<8x128xf32>
    %201 = arith.mulf %167, %200 : vector<8x128xf32>
    %202 = arith.addf %198, %201 : vector<8x128xf32>
    %c49 = arith.constant 49 : index
    %203 = memref.load %arg1[%c49] : memref<53xf32, #tpu.memory_space<smem>>
    %204 = vector.broadcast %203 : f32 to vector<8x128xf32>
    %205 = arith.addf %202, %204 : vector<8x128xf32>
    %cst_20 = arith.constant 0.000000e+00 : f32
    %206 = vector.broadcast %cst_20 : f32 to vector<8x128xf32>
    %207 = arith.maximumf %205, %206 : vector<8x128xf32>
    %c50 = arith.constant 50 : index
    %208 = memref.load %arg1[%c50] : memref<53xf32, #tpu.memory_space<smem>>
    %209 = vector.broadcast %208 : f32 to vector<8x128xf32>
    %210 = arith.mulf %187, %209 : vector<8x128xf32>
    %c51 = arith.constant 51 : index
    %211 = memref.load %arg1[%c51] : memref<53xf32, #tpu.memory_space<smem>>
    %212 = vector.broadcast %211 : f32 to vector<8x128xf32>
    %213 = arith.mulf %207, %212 : vector<8x128xf32>
    %214 = arith.addf %210, %213 : vector<8x128xf32>
    %c52 = arith.constant 52 : index
    %215 = memref.load %arg1[%c52] : memref<53xf32, #tpu.memory_space<smem>>
    %216 = vector.broadcast %215 : f32 to vector<8x128xf32>
    %217 = arith.addf %214, %216 : vector<8x128xf32>
    %cst_21 = arith.constant 0.000000e+00 : f32
    %218 = vector.broadcast %cst_21 : f32 to vector<8x128xf32>
    %219 = arith.subf %218, %217 : vector<8x128xf32>
    %220 = math.exp %219 : vector<8x128xf32>
    %cst_22 = arith.constant 1.000000e+00 : f32
    %221 = vector.broadcast %cst_22 : f32 to vector<8x128xf32>
    %222 = arith.addf %221, %220 : vector<8x128xf32>
    %223 = tpu.reciprocal %222 {approx = true} : vector<8x128xf32> -> vector<8x128xf32>
    %c0_23 = arith.constant 0 : index
    %c0_24 = arith.constant 0 : index
    %224 = vector.load %arg3[%c0_23, %c0_24] : memref<8x128xf32, #tpu.memory_space<vmem>>, vector<8x128xf32>
    tpu.vector_store %arg3[%c0_23, %c0_24], %223 {strides = array<i32>} : memref<8x128xf32, #tpu.memory_space<vmem>>, vector<8x128xf32>,
    return
  }
  func.func @transform_0(%arg0: i32, %arg1: memref<53xf32, #tpu.memory_space<smem>>) -> (i32, i32, i32) {
    %c0_i32 = arith.constant 0 : i32
    %c0_i32_0 = arith.constant 0 : i32
    %c0_i32_1 = arith.constant 0 : i32
    return %c0_i32, %c0_i32_0, %arg0 : i32, i32, i32
  }
  func.func @transform_1(%arg0: i32, %arg1: memref<53xf32, #tpu.memory_space<smem>>) -> (i32, i32) {
    %c0_i32 = arith.constant 0 : i32
    %c0_i32_0 = arith.constant 0 : i32
    return %c0_i32, %arg0 : i32, i32
  }
}

</mosaic_0001>

<llo_original>
// kernel: network_forward.1
$region0: #{network_forward.1}
  #allocation0 [shape = 'u32[]', space=smem, size = 0x4, offset = 0x4, fixed_abs, tag = 'smem constant byte address 0x4 - core index']
  #allocation1 [shape = 'u32[144,128]{1,0:T(1,128)}', space=vmem, size = 0x12000, scoped, tag = 'internal scratch']
  #allocation2 [shape = 's32[1]{0}', space=sflag, size = 0x4, scoped, tag = 'scoped memory for network_forward.1']
  #allocation3 [shape = 'u8[512]{0}', space=smem, size = 0x200, scoped, tag = 'prefetched SMEM operand 0']
  %s0 = inlined_call_operand.vmem [shape: f32[53], index: 0, kind: input, shape index: {}]
  %s1 = inlined_call_operand.vmem [shape: f32[4,8,128], index: 1, kind: input, shape index: {}]
  %s2 = inlined_call_operand.vmem [shape: f32[8,128], index: 2, kind: output, shape index: {}]
  %s3 = sld [smem:[#allocation0]]
  $region14: #{network_forward.1} parent=0
    _
  %s5 = ssub.s32 1, %s3
  %s6 = scalar_select 0, %s5, %s3
  %s7 = sshll.u32 %s0, 4
  %s8 = int_to_ptr.vmem [resolvable:$true] %s7
  %10 = dma.vmem_to_smem %s8, 16, [#allocation3], [#allocation2]
  %11 = dma.done [#allocation2], 16
  %12 = sfence
  // Predicated region
  $region2: #{network_forward.1} parent=0 // pred_check
    _
  $region3: #{network_forward.1} parent=0 // pred_check_branch
    %14 = sbr.rel (0) target = $region5
  $region4: #{network_forward.1} parent=0 // pred_region
    _
  $region5: #{network_forward.1} parent=0 // pred_fallthru
    _
  %v15 = vld [vmem:[%s1] sm:$0xff]
  %s16 = scalar_lea.vmem %s1, 8
  %v17 = vld [vmem:[%s16] sm:$0xff]
  %s18 = scalar_lea.vmem %s1, 16
  %v19 = vld [vmem:[%s18] sm:$0xff]
  %s20 = scalar_lea.vmem %s1, 24
  %v21 = vld [vmem:[%s20] sm:$0xff]
  %s22 = sld [smem:[#allocation3]]
  %v23 = vstv %s22
  %v24 = vmul.f32 %v15, %v23
  %s25 = sld [smem:[#allocation3 + $0x1]]
  %v26 = vstv %s25
  %v27 = vmul.f32 %v17, %v26
  %v28 = vadd.f32 %v24, %v27
  %s29 = sld [smem:[#allocation3 + $0x2]]
  %v30 = vstv %s29
  %v31 = vmul.f32 %v19, %v30
  %v32 = vadd.f32 %v28, %v31
  %s33 = sld [smem:[#allocation3 + $0x3]]
  %v34 = vstv %s33
  %v35 = vmul.f32 %v21, %v34
  %v36 = vadd.f32 %v32, %v35
  %s37 = sld [smem:[#allocation3 + $0x10]]
  %v38 = vstv %s37
  %v39 = vadd.f32 %v36, %v38
  %v40 = vmax.f32 %v39, 0.0
  %s41 = sld [smem:[#allocation3 + $0x4]]
  %v42 = vstv %s41
  %v43 = vmul.f32 %v15, %v42
  %s44 = sld [smem:[#allocation3 + $0x5]]
  %v45 = vstv %s44
  %v46 = vmul.f32 %v17, %v45
  %v47 = vadd.f32 %v43, %v46
  %s48 = sld [smem:[#allocation3 + $0x6]]
  %v49 = vstv %s48
  %v50 = vmul.f32 %v19, %v49
  %v51 = vadd.f32 %v47, %v50
  %s52 = sld [smem:[#allocation3 + $0x7]]
  %v53 = vstv %s52
  %v54 = vmul.f32 %v21, %v53
  %v55 = vadd.f32 %v51, %v54
  %s56 = sld [smem:[#allocation3 + $0x11]]
  %v57 = vstv %s56
  %v58 = vadd.f32 %v55, %v57
  %v59 = vmax.f32 %v58, 0.0
  %s60 = sld [smem:[#allocation3 + $0x8]]
  %v61 = vstv %s60
  %v62 = vmul.f32 %v15, %v61
  %s63 = sld [smem:[#allocation3 + $0x9]]
  %v64 = vstv %s63
  %v65 = vmul.f32 %v17, %v64
  %v66 = vadd.f32 %v62, %v65
  %s67 = sld [smem:[#allocation3 + $0xa]]
  %v68 = vstv %s67
  %v69 = vmul.f32 %v19, %v68
  %v70 = vadd.f32 %v66, %v69
  %s71 = sld [smem:[#allocation3 + $0xb]]
  %v72 = vstv %s71
  %v73 = vmul.f32 %v21, %v72
  %v74 = vadd.f32 %v70, %v73
  %s75 = sld [smem:[#allocation3 + $0x12]]
  %v76 = vstv %s75
  %v77 = vadd.f32 %v74, %v76
  %v78 = vmax.f32 %v77, 0.0
  %s79 = sld [smem:[#allocation3 + $0xc]]
  %v80 = vstv %s79
  %v81 = vmul.f32 %v15, %v80
  %s82 = sld [smem:[#allocation3 + $0xd]]
  %v83 = vstv %s82
  %v84 = vmul.f32 %v17, %v83
  %v85 = vadd.f32 %v81, %v84
  %s86 = sld [smem:[#allocation3 + $0xe]]
  %v87 = vstv %s86
  %v88 = vmul.f32 %v19, %v87
  %v89 = vadd.f32 %v85, %v88
  %s90 = sld [smem:[#allocation3 + $0xf]]
  %v91 = vstv %s90
  %v92 = vmul.f32 %v21, %v91
  %v93 = vadd.f32 %v89, %v92
  %s94 = sld [smem:[#allocation3 + $0x13]]
  %v95 = vstv %s94
  %v96 = vadd.f32 %v93, %v95
  %v97 = vmax.f32 %v96, 0.0
  %s98 = sld [smem:[#allocation3 + $0x14]]
  %v99 = vstv %s98
  %v100 = vmul.f32 %v40, %v99
  %s101 = sld [smem:[#allocation3 + $0x15]]
  %v102 = vstv %s101
  %v103 = vmul.f32 %v59, %v102
  %v104 = vadd.f32 %v100, %v103
  %s105 = sld [smem:[#allocation3 + $0x16]]
  %v106 = vstv %s105
  %v107 = vmul.f32 %v78, %v106
  %v108 = vadd.f32 %v104, %v107
  %s109 = sld [smem:[#allocation3 + $0x17]]
  %v110 = vstv %s109
  %v111 = vmul.f32 %v97, %v110
  %v112 = vadd.f32 %v108, %v111
  %s113 = sld [smem:[#allocation3 + $0x24]]
  %v114 = vstv %s113
  %v115 = vadd.f32 %v112, %v114
  %v116 = vmax.f32 %v115, 0.0
  %s117 = sld [smem:[#allocation3 + $0x18]]
  %v118 = vstv %s117
  %v119 = vmul.f32 %v40, %v118
  %s120 = sld [smem:[#allocation3 + $0x19]]
  %v121 = vstv %s120
  %v122 = vmul.f32 %v59, %v121
  %v123 = vadd.f32 %v119, %v122
  %s124 = sld [smem:[#allocation3 + $0x1a]]
  %v125 = vstv %s124
  %v126 = vmul.f32 %v78, %v125
  %v127 = vadd.f32 %v123, %v126
  %s128 = sld [smem:[#allocation3 + $0x1b]]
  %v129 = vstv %s128
  %v130 = vmul.f32 %v97, %v129
  %v131 = vadd.f32 %v127, %v130
  %s132 = sld [smem:[#allocation3 + $0x25]]
  %v133 = vstv %s132
  %v134 = vadd.f32 %v131, %v133
  %v135 = vmax.f32 %v134, 0.0
  %s136 = sld [smem:[#allocation3 + $0x1c]]
  %v137 = vstv %s136
  %v138 = vmul.f32 %v40, %v137
  %s139 = sld [smem:[#allocation3 + $0x1d]]
  %v140 = vstv %s139
  %v141 = vmul.f32 %v59, %v140
  %v142 = vadd.f32 %v138, %v141
  %s143 = sld [smem:[#allocation3 + $0x1e]]
  %v144 = vstv %s143
  %v145 = vmul.f32 %v78, %v144
  %v146 = vadd.f32 %v142, %v145
  %s147 = sld [smem:[#allocation3 + $0x1f]]
  %v148 = vstv %s147
  %v149 = vmul.f32 %v97, %v148
  %v150 = vadd.f32 %v146, %v149
  %s151 = sld [smem:[#allocation3 + $0x26]]
  %v152 = vstv %s151
  %v153 = vadd.f32 %v150, %v152
  %v154 = vmax.f32 %v153, 0.0
  %s155 = sld [smem:[#allocation3 + $0x20]]
  %v156 = vstv %s155
  %v157 = vmul.f32 %v40, %v156
  %s158 = sld [smem:[#allocation3 + $0x21]]
  %v159 = vstv %s158
  %v160 = vmul.f32 %v59, %v159
  %v161 = vadd.f32 %v157, %v160
  %s162 = sld [smem:[#allocation3 + $0x22]]
  %v163 = vstv %s162
  %v164 = vmul.f32 %v78, %v163
  %v165 = vadd.f32 %v161, %v164
  %s166 = sld [smem:[#allocation3 + $0x23]]
  %v167 = vstv %s166
  %v168 = vmul.f32 %v97, %v167
  %v169 = vadd.f32 %v165, %v168
  %s170 = sld [smem:[#allocation3 + $0x27]]
  %v171 = vstv %s170
  %v172 = vadd.f32 %v169, %v171
  %v173 = vmax.f32 %v172, 0.0
  %s174 = sld [smem:[#allocation3 + $0x28]]
  %v175 = vstv %s174
  %v176 = vmul.f32 %v116, %v175
  %s177 = sld [smem:[#allocation3 + $0x29]]
  %v178 = vstv %s177
  %v179 = vmul.f32 %v135, %v178
  %v180 = vadd.f32 %v176, %v179
  %s181 = sld [smem:[#allocation3 + $0x2a]]
  %v182 = vstv %s181
  %v183 = vmul.f32 %v154, %v182
  %v184 = vadd.f32 %v180, %v183
  %s185 = sld [smem:[#allocation3 + $0x2b]]
  %v186 = vstv %s185
  %v187 = vmul.f32 %v173, %v186
  %v188 = vadd.f32 %v184, %v187
  %s189 = sld [smem:[#allocation3 + $0x30]]
  %v190 = vstv %s189
  %v191 = vadd.f32 %v188, %v190
  %v192 = vmax.f32 %v191, 0.0
  %s193 = sld [smem:[#allocation3 + $0x2c]]
  %v194 = vstv %s193
  %v195 = vmul.f32 %v116, %v194
  %s196 = sld [smem:[#allocation3 + $0x2d]]
  %v197 = vstv %s196
  %v198 = vmul.f32 %v135, %v197
  %v199 = vadd.f32 %v195, %v198
  %s200 = sld [smem:[#allocation3 + $0x2e]]
  %v201 = vstv %s200
  %v202 = vmul.f32 %v154, %v201
  %v203 = vadd.f32 %v199, %v202
  %s204 = sld [smem:[#allocation3 + $0x2f]]
  %v205 = vstv %s204
  %v206 = vmul.f32 %v173, %v205
  %v207 = vadd.f32 %v203, %v206
  %s208 = sld [smem:[#allocation3 + $0x31]]
  %v209 = vstv %s208
  %v210 = vadd.f32 %v207, %v209
  %v211 = vmax.f32 %v210, 0.0
  %s212 = sld [smem:[#allocation3 + $0x32]]
  %v213 = vstv %s212
  %v214 = vmul.f32 %v192, %v213
  %s215 = sld [smem:[#allocation3 + $0x33]]
  %v216 = vstv %s215
  %v217 = vmul.f32 %v211, %v216
  %v218 = vadd.f32 %v214, %v217
  %s219 = sld [smem:[#allocation3 + $0x34]]
  %v220 = vstv %s219
  %v221 = vadd.f32 %v218, %v220
  %v222 = vsub.f32 0.0, %v221
  %v223 = vmul.f32 %v222, 1.442695
  %v224 = vpow.pop %v223
  %v225 = vadd.f32 %v224, 1.0
  %v226 = vrcp.pop %v225
  %227 = vst [vmem:[%s2] sm:$0xff] %v226
  // Predicated region
  $region6: #{network_forward.1} parent=0 // pred_check
    _
  $region7: #{network_forward.1} parent=0 // pred_check_branch
    %229 = sbr.rel (0) target = $region9
  $region8: #{network_forward.1} parent=0 // pred_region
    _
  $region9: #{network_forward.1} parent=0 // pred_fallthru
    _
  // Predicated region
  $region10: #{network_forward.1} parent=0 // pred_check
    _
  $region11: #{network_forward.1} parent=0 // pred_check_branch
    %231 = sbr.rel (0) target = $region13
  $region12: #{network_forward.1} parent=0 // pred_region
    _
  $region13: #{network_forward.1} parent=0 // pred_fallthru
    _

</llo_original>
